<compile_context>
chip_gen: v6e
topology: v6e:2x2x1
jax: 0.10.0
libtpu: 0.0.40
codegen_flags: <defaults>
</compile_context>

<pallas_src>
import jax
import jax.numpy as jnp
from jax.experimental import pallas as pl
from jax.experimental.pallas import tpu as pltpu


def _penalized_tanh_kernel(x_ref, o_ref):
    t = jnp.tanh(x_ref[...])                       # EUP
    o_ref[...] = 0.75 * jax.nn.relu(t) + 0.25 * t  # VPU


def penalized_tanh(x, *, lane_width=512, max_block_rows=1024):
    """Elementwise 0.75*relu(tanh(x)) + 0.25*tanh(x) via a tiled Pallas kernel.

    Works for any shape/size: the array is flattened, zero-padded to a
    lane-dense (rows, lane_width) slab, processed in large VMEM tiles, then
    sliced back to the original shape.
    """
    orig_shape = x.shape
    dtype = x.dtype
    n = x.size
    if n == 0:
        return x

    cols = lane_width                               # multiple of 128 (lane dim)
    rows = pl.cdiv(n, cols)

    # Block rows: multiple of 8 (sublane), capped so one block stays ~2 MiB.
    block_rows = min(max_block_rows, ((rows + 7) // 8) * 8)
    block_rows = ((block_rows + 7) // 8) * 8
    rows_padded = pl.cdiv(rows, block_rows) * block_rows

    flat = jnp.pad(x.reshape(-1), (0, rows_padded * cols - n))
    x2d = flat.reshape(rows_padded, cols)

    grid = (rows_padded // block_rows,)
    out2d = pl.pallas_call(
        _penalized_tanh_kernel,
        out_shape=jax.ShapeDtypeStruct((rows_padded, cols), dtype),
        grid=grid,
        in_specs=[pl.BlockSpec((block_rows, cols), lambda i: (i, 0))],
        out_specs=pl.BlockSpec((block_rows, cols), lambda i: (i, 0)),
        compiler_params=pltpu.CompilerParams(
            dimension_semantics=("parallel",)),
    )(x2d)

    return out2d.reshape(-1)[:n].reshape(orig_shape)


def _reference(x):
    t = jnp.tanh(x)
    return 0.75 * jax.nn.relu(t) + 0.25 * t


if __name__ == "__main__":
    key = jax.random.PRNGKey(0)
    k0, k1, k2 = jax.random.split(key, 3)

    fn = jax.jit(penalized_tanh)

    # Shape implied by the module usage: a generic activation tensor.
    x_main = jax.random.normal(k0, (2, 4, 16, 16), jnp.float32) * 3.0
    # Odd / non-aligned shape to exercise the padding path.
    x_odd = jax.random.normal(k1, (3, 1000, 7), jnp.float32) * 2.0
    # Larger shape to exercise the multi-block grid path.
    x_big = jax.random.normal(k2, (4096, 640), jnp.float32)

    outs = []
    for x in (x_main, x_odd, x_big):
        y = fn(x)
        jax.block_until_ready(y)
        y_ref = _reference(x)
        assert y.shape == x.shape and y.dtype == x.dtype
        assert bool(jnp.all(jnp.isfinite(y)))
        assert bool(jnp.allclose(y, y_ref, atol=1e-6, rtol=1e-6)), "mismatch vs reference"
        outs.append(y)

    jax.block_until_ready(outs)
    print("KERNEL_OK")
</pallas_src>

<mosaic_0001>
module attributes {stable_mosaic.version = 11 : i64} {
  func.func @_penalized_tanh_kernel(%arg0: i32, %arg1: memref<8x512xf32, #tpu.memory_space<vmem>>, %arg2: memref<8x512xf32, #tpu.memory_space<vmem>>) attributes {dimension_semantics = [#tpu.dimension_semantics<parallel>], iteration_bounds = array<i64: 1>, scalar_prefetch = 0 : i64, scratch_operands = 0 : i64, tpu.core_type = #tpu.core_type<tc>, window_params = [{transform_indices = @transform_0, window_bounds = array<i64: 8, 512>}, {transform_indices = @transform_1, window_bounds = array<i64: 8, 512>}]} {
    %c0 = arith.constant 0 : index
    %c0_0 = arith.constant 0 : index
    %0 = vector.load %arg1[%c0, %c0_0] : memref<8x512xf32, #tpu.memory_space<vmem>>, vector<8x512xf32>
    %1 = math.tanh %0 : vector<8x512xf32>
    %cst = arith.constant 0.000000e+00 : f32
    %2 = vector.broadcast %cst : f32 to vector<8x512xf32>
    %3 = arith.maximumf %1, %2 : vector<8x512xf32>
    %cst_1 = arith.constant 7.500000e-01 : f32
    %4 = vector.broadcast %cst_1 : f32 to vector<8x512xf32>
    %5 = arith.mulf %4, %3 : vector<8x512xf32>
    %cst_2 = arith.constant 2.500000e-01 : f32
    %6 = vector.broadcast %cst_2 : f32 to vector<8x512xf32>
    %7 = arith.mulf %6, %1 : vector<8x512xf32>
    %8 = arith.addf %5, %7 : vector<8x512xf32>
    %c0_3 = arith.constant 0 : index
    %c0_4 = arith.constant 0 : index
    %9 = vector.load %arg2[%c0_3, %c0_4] : memref<8x512xf32, #tpu.memory_space<vmem>>, vector<8x512xf32>
    tpu.vector_store %arg2[%c0_3, %c0_4], %8 {strides = array<i32>} : memref<8x512xf32, #tpu.memory_space<vmem>>, vector<8x512xf32>,
    return
  }
  func.func @transform_0(%arg0: i32) -> (i32, i32) {
    %c0_i32 = arith.constant 0 : i32
    %c0_i32_0 = arith.constant 0 : i32
    return %arg0, %c0_i32 : i32, i32
  }
  func.func @transform_1(%arg0: i32) -> (i32, i32) {
    %c0_i32 = arith.constant 0 : i32
    %c0_i32_0 = arith.constant 0 : i32
    return %arg0, %c0_i32 : i32, i32
  }
}

</mosaic_0001>

<llo_original>
// kernel: penalized_tanh.1
$region0: #{penalized_tanh.1}
  #allocation0 [shape = 'u32[]', space=smem, size = 0x4, offset = 0x4, fixed_abs, tag = 'smem constant byte address 0x4 - core index']
  #allocation1 [shape = 'u32[144,128]{1,0:T(1,128)}', space=vmem, size = 0x12000, scoped, tag = 'internal scratch']
  %s0 = inlined_call_operand.vmem [shape: f32[8,512], index: 0, kind: input, shape index: {}]
  %s1 = inlined_call_operand.vmem [shape: f32[8,512], index: 1, kind: output, shape index: {}]
  %s2 = sld [smem:[#allocation0]]
  $region14: #{penalized_tanh.1} parent=0
    _
  %s4 = ssub.s32 1, %s2
  %s5 = scalar_select 0, %s4, %s2
  // Predicated region
  $region2: #{penalized_tanh.1} parent=0 // pred_check
    _
  $region3: #{penalized_tanh.1} parent=0 // pred_check_branch
    %7 = sbr.rel (0) target = $region5
  $region4: #{penalized_tanh.1} parent=0 // pred_region
    _
  $region5: #{penalized_tanh.1} parent=0 // pred_fallthru
    _
  %v8 = vld [vmem:[%s0] sm:$0xff]
  %v9 = vld [vmem:[%s0 + $0x8] sm:$0xff]
  %v10 = vld [vmem:[%s0 + $0x10] sm:$0xff]
  %v11 = vld [vmem:[%s0 + $0x18] sm:$0xff]
  %v12 = vtanh.pop %v8
  %v13 = vtanh.pop %v9
  %v14 = vtanh.pop %v10
  %v15 = vtanh.pop %v11
  %v16 = vmax.f32 %v12, 0.0
  %v17 = vmax.f32 %v13, 0.0
  %v18 = vmax.f32 %v14, 0.0
  %v19 = vmax.f32 %v15, 0.0
  %v20 = vmul.f32 %v16, 0.75
  %v21 = vmul.f32 %v17, 0.75
  %v22 = vmul.f32 %v18, 0.75
  %v23 = vmul.f32 %v19, 0.75
  %v24 = vmul.f32 %v12, 0.25
  %v25 = vmul.f32 %v13, 0.25
  %v26 = vmul.f32 %v14, 0.25
  %v27 = vmul.f32 %v15, 0.25
  %v28 = vadd.f32 %v20, %v24
  %v29 = vadd.f32 %v21, %v25
  %v30 = vadd.f32 %v22, %v26
  %v31 = vadd.f32 %v23, %v27
  %32 = vst [vmem:[%s1] sm:$0xff] %v28
  %33 = vst [vmem:[%s1 + $0x8] sm:$0xff] %v29
  %34 = vst [vmem:[%s1 + $0x10] sm:$0xff] %v30
  %35 = vst [vmem:[%s1 + $0x18] sm:$0xff] %v31
  // Predicated region
  $region6: #{penalized_tanh.1} parent=0 // pred_check
    _
  $region7: #{penalized_tanh.1} parent=0 // pred_check_branch
    %37 = sbr.rel (0) target = $region9
  $region8: #{penalized_tanh.1} parent=0 // pred_region
    _
  $region9: #{penalized_tanh.1} parent=0 // pred_fallthru
    _
  // Predicated region
  $region10: #{penalized_tanh.1} parent=0 // pred_check
    _
  $region11: #{penalized_tanh.1} parent=0 // pred_check_branch
    %39 = sbr.rel (0) target = $region13
  $region12: #{penalized_tanh.1} parent=0 // pred_region
    _
  $region13: #{penalized_tanh.1} parent=0 // pred_fallthru
    _

</llo_original>
